<compile_context>
chip_gen: v5e
topology: v5e:2x2
jax: 0.10.0
libtpu: 0.0.40
codegen_flags: <defaults>
</compile_context>

<pallas_src>
import numpy as np

import jax
import jax.numpy as jnp
from jax.experimental import pallas as pl
from jax.experimental.pallas import tpu as pltpu


LANE = 128


def _round_up(n, m):
    return ((n + m - 1) // m) * m


# ----------------------------------------------------------------------------- kernel
def patch_embed_kernel(xp_ref, w_ref, posb_ref, clsp_ref, out_ref):
    """One image per grid step.

    xp_ref:   (n_patches, Kp)      bf16   patch vectors (zero-padded K)
    w_ref:    (Kp, Ep)             bf16   flattened conv weight (zero-padded)
    posb_ref: (n_patches, Ep)      f32    positions[1:] + conv bias (pre-folded)
    clsp_ref: (1, Ep)              f32    cls token + positions[0]   (pre-folded)
    out_ref:  (n_patches+1, Ep)    f32    output token slab for this image
    """
    # MXU matmul: bf16 inputs, fp32 accumulation.
    proj = jnp.dot(xp_ref[...], w_ref[...], preferred_element_type=jnp.float32)
    n_patches = proj.shape[0]

    # Row 0: cls token (+ its position), rows 1..n: projected patches (+bias+pos).
    out_ref[pl.ds(0, 1), :] = clsp_ref[...].astype(out_ref.dtype)
    out_ref[pl.ds(1, n_patches), :] = (proj + posb_ref[...]).astype(out_ref.dtype)


# ----------------------------------------------------------------------------- params
def init_params(in_channels, patch, emb_size, img_size, key):
    """Deterministic synthetic parameters with the module's shapes."""
    K = in_channels * patch * patch
    n_patches = (img_size // patch) ** 2
    kw, kb, kc, kp = jax.random.split(key, 4)
    params = {
        # Conv2d weight (E, C, p, p) and bias (E,)
        "w": jax.random.normal(kw, (emb_size, in_channels, patch, patch),
                               jnp.float32) / np.sqrt(K),
        "b": jax.random.normal(kb, (emb_size,), jnp.float32) * 0.02,
        # cls_token (1, 1, E), positions (n_patches+1, E)
        "cls": jax.random.normal(kc, (1, 1, emb_size), jnp.float32),
        "pos": jax.random.normal(kp, (n_patches + 1, emb_size), jnp.float32),
    }
    return params


def prepare_params(params):
    """One-time host-side prep: flatten conv weight to (K, E) in (c, ph, pw) order,
    fold bias/cls into the position tables, zero-pad K and E to lane multiples,
    pre-cast the matmul operands to bf16."""
    w = params["w"]
    E, C, p, _ = w.shape
    K = C * p * p
    Kp, Ep = _round_up(K, LANE), _round_up(E, LANE)

    # (E, C, p, p) -> (K, E); row-major (c, ph, pw) matches the patch extraction below.
    # TODO(synk): if importing real PyTorch weights, this flatten order must match.
    w2d = jnp.pad(w.reshape(E, K).T, ((0, Kp - K), (0, Ep - E))).astype(jnp.bfloat16)

    pos = params["pos"]                                       # (n_patches+1, E)
    posb = pos[1:] + params["b"][None, :]                      # fold conv bias
    posb = jnp.pad(posb, ((0, 0), (0, Ep - E))).astype(jnp.float32)
    clsp = params["cls"].reshape(1, E) + pos[0:1]              # cls + positions[0]
    clsp = jnp.pad(clsp, ((0, 0), (0, Ep - E))).astype(jnp.float32)

    return {"w2d": w2d, "posb": posb, "clsp": clsp, "K": K, "E": E,
            "Kp": Kp, "Ep": Ep, "patch": p, "in_channels": C}


# ---------------------------------------------------------------------------- wrapper
def patch_embedding(x, prepped):
    """x: (B, C, H, W) float32 -> (B, n_patches+1, E) float32."""
    B, C, H, W = x.shape
    patch = prepped["patch"]
    assert C == prepped["in_channels"]
    assert H % patch == 0 and W % patch == 0, "image size must be divisible by patch"
    nh, nw = H // patch, W // patch
    n_patches = nh * nw
    K, E, Kp, Ep = prepped["K"], prepped["E"], prepped["Kp"], prepped["Ep"]

    # Patch extraction (layout plumbing done once in XLA outside the kernel):
    # (B, C, H, W) -> (B, nh, nw, C, p, p) -> (B, n_patches, K), K-padded, bf16.
    xp = x.reshape(B, C, nh, patch, nw, patch)
    xp = xp.transpose(0, 2, 4, 1, 3, 5).reshape(B, n_patches, K)
    xp = jnp.pad(xp, ((0, 0), (0, 0), (0, Kp - K))).astype(jnp.bfloat16)

    w2d, posb, clsp = prepped["w2d"], prepped["posb"], prepped["clsp"]

    flops = 2 * B * n_patches * Kp * Ep
    bytes_accessed = int(xp.size * 2 + w2d.size * 2 + posb.size * 4 + clsp.size * 4
                         + B * (n_patches + 1) * Ep * 4)

    out_padded = pl.pallas_call(
        patch_embed_kernel,
        out_shape=jax.ShapeDtypeStruct((B, n_patches + 1, Ep), jnp.float32),
        grid=(B,),
        in_specs=[
            # Per-image patch block (batch dim squeezed out of the kernel view).
            pl.BlockSpec((None, n_patches, Kp), lambda b: (b, 0, 0)),
            # Grid-invariant operands: stay VMEM-resident across iterations.
            pl.BlockSpec((Kp, Ep), lambda b: (0, 0)),
            pl.BlockSpec((n_patches, Ep), lambda b: (0, 0)),
            pl.BlockSpec((1, Ep), lambda b: (0, 0)),
        ],
        out_specs=pl.BlockSpec((None, n_patches + 1, Ep), lambda b: (b, 0, 0)),
        compiler_params=pltpu.CompilerParams(
            dimension_semantics=("parallel",),      # shard batch across TCs on v7x
            vmem_limit_bytes=32 * 1024 * 1024,
        ),
        cost_estimate=pl.CostEstimate(
            flops=flops, transcendentals=0, bytes_accessed=bytes_accessed),
    )(xp, w2d, posb, clsp)

    # Slice off the lane padding (no-op when E is already a multiple of 128).
    return out_padded[:, :, :E]


# -------------------------------------------------------------------------- reference
def patch_embedding_ref(x, params, *, patch):
    """Pure-JAX reference mirroring the PyTorch forward (conv -> rearrange ->
    cls concat -> +positions).  Uses bf16 conv inputs / fp32 accumulation to
    match the kernel's MXU quantization."""
    B = x.shape[0]
    E = params["w"].shape[0]
    conv = jax.lax.conv_general_dilated(
        x.astype(jnp.bfloat16), params["w"].astype(jnp.bfloat16),
        window_strides=(patch, patch), padding="VALID",
        dimension_numbers=("NCHW", "OIHW", "NCHW"),
        preferred_element_type=jnp.float32)                    # (B, E, h, w)
    _, _, h, w = conv.shape
    tokens = conv.reshape(B, E, h * w).transpose(0, 2, 1)      # b (h w) e
    tokens = tokens + params["b"][None, None, :]
    cls = jnp.broadcast_to(params["cls"], (B, 1, E))
    out = jnp.concatenate([cls, tokens], axis=1)
    return out + params["pos"][None, :, :]


# ------------------------------------------------------------------------------- main
if __name__ == "__main__":
    in_channels, patch, emb_size, img_size = 1, 7, 16, 28
    B = 2
    n_patches = (img_size // patch) ** 2

    key = jax.random.PRNGKey(0)
    kx, kparam = jax.random.split(key)
    x = jax.random.normal(kx, (B, in_channels, img_size, img_size), jnp.float32)

    params = init_params(in_channels, patch, emb_size, img_size, kparam)
    prepped = prepare_params(params)

    out = jax.block_until_ready(patch_embedding(x, prepped))
    assert out.shape == (B, n_patches + 1, emb_size), out.shape

    ref = jax.block_until_ready(patch_embedding_ref(x, params, patch=patch))
    np.testing.assert_allclose(np.asarray(out), np.asarray(ref), rtol=1e-3, atol=1e-3)

    print("KERNEL_OK")
</pallas_src>

<mosaic_0001>
module attributes {stable_mosaic.version = 11 : i64} {
  func.func @patch_embed_kernel(%arg0: i32, %arg1: memref<1x16x128xbf16, #tpu.memory_space<vmem>>, %arg2: memref<128x128xbf16, #tpu.memory_space<vmem>>, %arg3: memref<16x128xf32, #tpu.memory_space<vmem>>, %arg4: memref<1x128xf32, #tpu.memory_space<vmem>>, %arg5: memref<1x17x128xf32, #tpu.memory_space<vmem>>) attributes {dimension_semantics = [#tpu.dimension_semantics<parallel>], iteration_bounds = array<i64: 2>, scalar_prefetch = 0 : i64, scratch_operands = 0 : i64, tpu.core_type = #tpu.core_type<tc>, window_params = [{transform_indices = @transform_0, window_bounds = array<i64: 1, 16, 128>}, {pipeline_mode = #tpu.pipeline_mode<synchronous>, transform_indices = @transform_1, window_bounds = array<i64: 128, 128>}, {pipeline_mode = #tpu.pipeline_mode<synchronous>, transform_indices = @transform_2, window_bounds = array<i64: 16, 128>}, {pipeline_mode = #tpu.pipeline_mode<synchronous>, transform_indices = @transform_3, window_bounds = array<i64: 1, 128>}, {transform_indices = @transform_4, window_bounds = array<i64: 1, 17, 128>}]} {
    %c0 = arith.constant 0 : index
    %c0_0 = arith.constant 0 : index
    %c0_1 = arith.constant 0 : index
    %0 = vector.load %arg1[%c0, %c0_0, %c0_1] : memref<1x16x128xbf16, #tpu.memory_space<vmem>>, vector<1x16x128xbf16>
    %1 = vector.shape_cast %0 : vector<1x16x128xbf16> to vector<16x128xbf16>
    %c0_2 = arith.constant 0 : index
    %c0_3 = arith.constant 0 : index
    %2 = vector.load %arg2[%c0_2, %c0_3] : memref<128x128xbf16, #tpu.memory_space<vmem>>, vector<128x128xbf16>
    %cst = arith.constant dense<0.000000e+00> : vector<16x128xf32>
    %3 = tpu.matmul %1, %2, %cst {dimension_numbers = #tpu.dot_dimension_numbers<[1], [0], [0], [1], [0, 0, 1, 1], [], []>} : vector<16x128xbf16>, vector<128x128xbf16>, vector<16x128xf32> -> vector<16x128xf32>
    %c0_4 = arith.constant 0 : index
    %c0_5 = arith.constant 0 : index
    %4 = vector.load %arg4[%c0_4, %c0_5] : memref<1x128xf32, #tpu.memory_space<vmem>>, vector<1x128xf32>
    %c0_6 = arith.constant 0 : index
    %c0_7 = arith.constant 0 : index
    %c0_8 = arith.constant 0 : index
    %5 = vector.load %arg5[%c0_6, %c0_7, %c0_8] : memref<1x17x128xf32, #tpu.memory_space<vmem>>, vector<1x1x128xf32>
    %6 = vector.shape_cast %5 : vector<1x1x128xf32> to vector<1x128xf32>
    %7 = vector.shape_cast %4 : vector<1x128xf32> to vector<1x1x128xf32>
    tpu.vector_store %arg5[%c0_6, %c0_7, %c0_8], %7 {strides = array<i32>} : memref<1x17x128xf32, #tpu.memory_space<vmem>>, vector<1x1x128xf32>,
    %c0_9 = arith.constant 0 : index
    %c0_10 = arith.constant 0 : index
    %8 = vector.load %arg3[%c0_9, %c0_10] : memref<16x128xf32, #tpu.memory_space<vmem>>, vector<16x128xf32>
    %9 = arith.addf %3, %8 : vector<16x128xf32>
    %c0_11 = arith.constant 0 : index
    %c1 = arith.constant 1 : index
    %c0_12 = arith.constant 0 : index
    %10 = vector.load %arg5[%c0_11, %c1, %c0_12] : memref<1x17x128xf32, #tpu.memory_space<vmem>>, vector<1x16x128xf32>
    %11 = vector.shape_cast %10 : vector<1x16x128xf32> to vector<16x128xf32>
    %12 = vector.shape_cast %9 : vector<16x128xf32> to vector<1x16x128xf32>
    tpu.vector_store %arg5[%c0_11, %c1, %c0_12], %12 {strides = array<i32>} : memref<1x17x128xf32, #tpu.memory_space<vmem>>, vector<1x16x128xf32>,
    return
  }
  func.func @transform_0(%arg0: i32) -> (i32, i32, i32) {
    %c0_i32 = arith.constant 0 : i32
    %c0_i32_0 = arith.constant 0 : i32
    %c0_i32_1 = arith.constant 0 : i32
    return %arg0, %c0_i32, %c0_i32_0 : i32, i32, i32
  }
  func.func @transform_1(%arg0: i32) -> (i32, i32) {
    %c0_i32 = arith.constant 0 : i32
    %c0_i32_0 = arith.constant 0 : i32
    %c0_i32_1 = arith.constant 0 : i32
    return %c0_i32, %c0_i32_0 : i32, i32
  }
  func.func @transform_2(%arg0: i32) -> (i32, i32) {
    %c0_i32 = arith.constant 0 : i32
    %c0_i32_0 = arith.constant 0 : i32
    %c0_i32_1 = arith.constant 0 : i32
    return %c0_i32, %c0_i32_0 : i32, i32
  }
  func.func @transform_3(%arg0: i32) -> (i32, i32) {
    %c0_i32 = arith.constant 0 : i32
    %c0_i32_0 = arith.constant 0 : i32
    %c0_i32_1 = arith.constant 0 : i32
    return %c0_i32, %c0_i32_0 : i32, i32
  }
  func.func @transform_4(%arg0: i32) -> (i32, i32, i32) {
    %c0_i32 = arith.constant 0 : i32
    %c0_i32_0 = arith.constant 0 : i32
    %c0_i32_1 = arith.constant 0 : i32
    return %arg0, %c0_i32, %c0_i32_0 : i32, i32, i32
  }
}

</mosaic_0001>

<llo_original>
// kernel: tpu_custom_call.1
$region0: #{tpu_custom_call.1}
  #allocation0 [shape = 'u32[]', space=smem, size = 0x4, offset = 0x4, fixed_abs, tag = 'smem constant byte address 0x4 - core index']
  #allocation1 [shape = 'u32[72,128]{1,0:T(1,128)}', space=vmem, size = 0x9000, scoped, tag = 'internal scratch']
  %s0 = inlined_call_operand.hbm [shape: bf16[2,16,128], index: 0, kind: input, shape index: {}]
  %s1 = inlined_call_operand.hbm [shape: bf16[128,128], index: 1, kind: input, shape index: {}]
  %s2 = inlined_call_operand.hbm [shape: f32[16,128], index: 2, kind: input, shape index: {}]
  %s3 = inlined_call_operand.vmem [shape: f32[1,128], index: 3, kind: input, shape index: {}]
  %s4 = inlined_call_operand.vmem [shape: f32[2,17,128], index: 4, kind: output, shape index: {}]
  %s5 = sld [smem:[#allocation0]]
  $region61: #{tpu_custom_call.1} parent=0
    _
  %s7 = ssub.s32 1, %s5
  %s8 = scalar_select 0, %s7, %s5
  $region1: #{tpu_custom_call.1} parent=0
    #allocation2 [shape = 'u8[8192]{0}', space=vmem, size = 0x2000, scoped, tag = 'input window, operand 0']
    #allocation3 [shape = 's32[2]{0}', space=sflag, size = 0x8, scoped, tag = 'scoped memory for tpu_custom_call.1']
    #allocation4 [shape = 'u8[32768]{0}', space=vmem, size = 0x8000, scoped, tag = 'input window, operand 1, single buffered']
    #allocation5 [shape = 's32[1]{0}', space=sflag, size = 0x4, scoped, tag = 'scoped memory for tpu_custom_call.1']
    #allocation6 [shape = 'u8[8192]{0}', space=vmem, size = 0x2000, scoped, tag = 'input window, operand 2, single buffered']
    %9 = vsyncpa [#allocation3], 0
    %s10 = scalar_lea.sflag [#allocation3], 1
    %11 = vsyncpa %s10, 0
    %12 = vsyncpa [#allocation5], 0
    loop: start=0, step=1, limit=4
    $region2: #{tpu_custom_call.1} parent=1 // loop_pre_header
      _
    $region3: #{tpu_custom_call.1} parent=1 // loop_header
      %s14 = sphi 0, %s18
      %p15 = scmp.ge.s32.totalorder %s14, 4
      %s24 = sphi 0, %s26
      %s27 = sphi 0, %s24
      %s28 = sphi 0, %s27
      %s44 = sphi 0, %s28
      %s48 = sphi 0, %s48
      %s50 = sphi 0, %s48
      %s51 = sphi 0, %s50
      %s65 = sphi 0, %s51
      %s69 = sphi 0, %s69
      %s71 = sphi 0, %s69
      %s72 = sphi 0, %s71
      %s86 = sphi 0, %s72
      %s90 = sphi 0, %s90
      %s92 = sphi 0, %s90
      %s93 = sphi 0, %s92
      %s107 = sphi 0, %s93
      %s113 = sphi 0, %s115
      %s116 = sphi 0, %s113
      %s117 = sphi 0, %s116
      %s133 = sphi 0, %s117
    $region4: #{tpu_custom_call.1} parent=1 // loop_header_branch
      %17 = sbr.rel (%p15) target = $region8
    $region5: #{tpu_custom_call.1} parent=1 // loop_body
      %s19 = ssub.s32 %s14, 1
      %s20 = ssub.s32 %s14, 2
      %s21 = sadd.s32 %s14, 1
      %s22 = ssub.s32 %s14, %s21
      %p23 = scmp.eq.s32.totalorder %s22, 0
      %s25 = sadd.s32 %s24, 1
      %s26 = scalar_select %p23, %s24, %s25
      %p29 = pneg %p23
      %p30 = scmp.eq.s32.totalorder %s14, 1
      %p31 = por %p29, %p30
      %p32 = scmp.ne.s32.totalorder %s24, %s27
      %p33 = scmp.eq.s32.totalorder %s14, 0
      %p34 = por %p32, %p33
      %p35 = scmp.ne.s32.totalorder %s24, %s27
      %p36 = scmp.eq.s32.totalorder %s19, 1
      %p37 = por %p35, %p36
      %p38 = scmp.ne.s32.totalorder %s27, %s28
      %p39 = scmp.eq.s32.totalorder %s19, 0
      %p40 = por %p38, %p39
      %p41 = scmp.ne.s32.totalorder %s27, %s28
      %p42 = scmp.eq.s32.totalorder %s20, 1
      %p43 = por %p41, %p42
      %p45 = scmp.ne.s32.totalorder %s28, %s44
      %p46 = scmp.eq.s32.totalorder %s20, 0
      %p47 = por %p45, %p46
      %s49 = sadd.s32 %s48, 1
      %p52 = scmp.eq.s32.totalorder %s14, 1
      %p53 = scmp.ne.s32.totalorder %s48, %s50
      %p54 = scmp.eq.s32.totalorder %s14, 0
      %p55 = por %p53, %p54
      %p56 = scmp.ne.s32.totalorder %s48, %s50
      %p57 = scmp.eq.s32.totalorder %s19, 1
      %p58 = por %p56, %p57
      %p59 = scmp.ne.s32.totalorder %s50, %s51
      %p60 = scmp.eq.s32.totalorder %s19, 0
      %p61 = por %p59, %p60
      %p62 = scmp.ne.s32.totalorder %s50, %s51
      %p63 = scmp.eq.s32.totalorder %s20, 1
      %p64 = por %p62, %p63
      %p66 = scmp.ne.s32.totalorder %s51, %s65
      %p67 = scmp.eq.s32.totalorder %s20, 0
      %p68 = por %p66, %p67
      %s70 = sadd.s32 %s69, 1
      %p73 = scmp.eq.s32.totalorder %s14, 1
      %p74 = scmp.ne.s32.totalorder %s69, %s71
      %p75 = scmp.eq.s32.totalorder %s14, 0
      %p76 = por %p74, %p75
      %p77 = scmp.ne.s32.totalorder %s69, %s71
      %p78 = scmp.eq.s32.totalorder %s19, 1
      %p79 = por %p77, %p78
      %p80 = scmp.ne.s32.totalorder %s71, %s72
      %p81 = scmp.eq.s32.totalorder %s19, 0
      %p82 = por %p80, %p81
      %p83 = scmp.ne.s32.totalorder %s71, %s72
      %p84 = scmp.eq.s32.totalorder %s20, 1
      %p85 = por %p83, %p84
      %p87 = scmp.ne.s32.totalorder %s72, %s86
      %p88 = scmp.eq.s32.totalorder %s20, 0
      %p89 = por %p87, %p88
      %s91 = sadd.s32 %s90, 1
      %p94 = scmp.eq.s32.totalorder %s14, 1
      %p95 = scmp.ne.s32.totalorder %s90, %s92
      %p96 = scmp.eq.s32.totalorder %s14, 0
      %p97 = por %p95, %p96
      %p98 = scmp.ne.s32.totalorder %s90, %s92
      %p99 = scmp.eq.s32.totalorder %s19, 1
      %p100 = por %p98, %p99
      %p101 = scmp.ne.s32.totalorder %s92, %s93
      %p102 = scmp.eq.s32.totalorder %s19, 0
      %p103 = por %p101, %p102
      %p104 = scmp.ne.s32.totalorder %s92, %s93
      %p105 = scmp.eq.s32.totalorder %s20, 1
      %p106 = por %p104, %p105
      %p108 = scmp.ne.s32.totalorder %s93, %s107
      %p109 = scmp.eq.s32.totalorder %s20, 0
      %p110 = por %p108, %p109
      %s111 = ssub.s32 %s14, %s21
      %p112 = scmp.eq.s32.totalorder %s111, 0
      %s114 = sadd.s32 %s113, 1
      %s115 = scalar_select %p112, %s113, %s114
      %p118 = pneg %p112
      %p119 = scmp.eq.s32.totalorder %s14, 1
      %p120 = por %p118, %p119
      %p121 = scmp.ne.s32.totalorder %s113, %s116
      %p122 = scmp.eq.s32.totalorder %s14, 0
      %p123 = por %p121, %p122
      %p124 = scmp.ne.s32.totalorder %s113, %s116
      %p125 = scmp.eq.s32.totalorder %s19, 1
      %p126 = por %p124, %p125
      %p127 = scmp.ne.s32.totalorder %s116, %s117
      %p128 = scmp.eq.s32.totalorder %s19, 0
      %p129 = por %p127, %p128
      %p130 = scmp.ne.s32.totalorder %s116, %s117
      %p131 = scmp.eq.s32.totalorder %s20, 1
      %p132 = por %p130, %p131
      %p134 = scmp.ne.s32.totalorder %s117, %s133
      %p135 = scmp.eq.s32.totalorder %s20, 0
      %p136 = por %p134, %p135
      %p137 = scmp.le.s32.totalorder 1, %s14
      %p138 = scmp.lt.s32.totalorder %s14, 3
      %p139 = pnand %p137, %p138
      %p140 = pneg %p139
      // Predicated region
      $region9: #{tpu_custom_call.1} parent=5 // pred_check
        _
      $region10: #{tpu_custom_call.1} parent=5 // pred_check_branch
        %142 = sbr.rel (%p139) target = $region12
      $region11: #{tpu_custom_call.1} parent=5 // pred_region
        %s143 = ssub.s32 %s14, 1
        // Predicated region
        $region13: #{tpu_custom_call.1} parent=11 // pred_check
          %p144 = pneg %p61
        $region14: #{tpu_custom_call.1} parent=11 // pred_check_branch
          %146 = sbr.rel (%p144) target = $region16
        $region15: #{tpu_custom_call.1} parent=11 // pred_region
          %148 = vsyncadd [#allocation5], 0
          %s149 = sshll.u32 %s1, 4
          %s150 = int_to_ptr.hbm [resolvable:$true] %s149
          %s151 = sshll.u32 [#allocation4], 4
          %s152 = int_to_ptr.vmem [resolvable:$true] %s151
          %157 = dma.hbm_to_vmem [thread:$0]  %s150, 1024, %s152, [#allocation5], 64, 64, 4
        $region16: #{tpu_custom_call.1} parent=11 // pred_fallthru
          _
        // Predicated region
        $region17: #{tpu_custom_call.1} parent=11 // pred_check
          %p158 = pneg %p82
        $region18: #{tpu_custom_call.1} parent=11 // pred_check_branch
          %160 = sbr.rel (%p158) target = $region20
        $region19: #{tpu_custom_call.1} parent=11 // pred_region
          %162 = vsyncadd [#allocation5], 0
          %s163 = sshll.u32 %s2, 4
          %s164 = int_to_ptr.hbm [resolvable:$true] %s163
          %s165 = sshll.u32 [#allocation6], 4
          %s166 = int_to_ptr.vmem [resolvable:$true] %s165
          %171 = dma.hbm_to_vmem [thread:$0]  %s164, 256, %s166, [#allocation5], 128, 128, 8
        $region20: #{tpu_custom_call.1} parent=11 // pred_fallthru
          _
        // Predicated region
        $region21: #{tpu_custom_call.1} parent=11 // pred_check
          %p172 = pneg %p103
        $region22: #{tpu_custom_call.1} parent=11 // pred_check_branch
          %174 = sbr.rel (%p172) target = $region24
        $region23: #{tpu_custom_call.1} parent=11 // pred_region
          _
        $region24: #{tpu_custom_call.1} parent=11 // pred_fallthru
          _
      $region12: #{tpu_custom_call.1} parent=5 // pred_fallthru
        _
      %p175 = scmp.lt.s32.totalorder %s14, 2
      // Predicated region
      $region25: #{tpu_custom_call.1} parent=5 // pred_check
        %p176 = pneg %p175
      $region26: #{tpu_custom_call.1} parent=5 // pred_check_branch
        %178 = sbr.rel (%p176) target = $region28
      $region27: #{tpu_custom_call.1} parent=5 // pred_region
        // Predicated region
        $region29: #{tpu_custom_call.1} parent=27 // pred_check
          %p179 = pneg %p34
        $region30: #{tpu_custom_call.1} parent=27 // pred_check_branch
          %181 = sbr.rel (%p179) target = $region32
        $region31: #{tpu_custom_call.1} parent=27 // pred_region
          %s182 = sand.u32 %s24, 1
          %s183 = scalar_lea.sflag [#allocation3], %s182
          %s184 = sand.u32 %s24, 1
          %s185 = smul.addr %s184, 8
          %s186 = scalar_lea.vmem [#allocation2], %s185
          %188 = vsyncadd %s183, 0
          %s189 = smul.addr %s14, 2
          %s190 = smul.addr %s189, 4
          %s191 = scalar_lea.hbm %s0, %s190
          %s192 = sshll.u32 %s191, 4
          %s193 = int_to_ptr.hbm [resolvable:$true] %s192
          %s194 = sshll.u32 %s186, 4
          %s195 = int_to_ptr.vmem [resolvable:$true] %s194
          %200 = dma.hbm_to_vmem [thread:$0]  %s193, 128, %s195, %s183, 64, 64, 4
        $region32: #{tpu_custom_call.1} parent=27 // pred_fallthru
          _
      $region28: #{tpu_custom_call.1} parent=5 // pred_fallthru
        _
      %p201 = scmp.le.s32.totalorder 1, %s14
      %p202 = scmp.lt.s32.totalorder %s14, 3
      %p203 = pnand %p201, %p202
      %p204 = pneg %p203
      // Predicated region
      $region33: #{tpu_custom_call.1} parent=5 // pred_check
        _
      $region34: #{tpu_custom_call.1} parent=5 // pred_check_branch
        %206 = sbr.rel (%p203) target = $region36
      $region35: #{tpu_custom_call.1} parent=5 // pred_region
        %s207 = ssub.s32 %s14, 1
        %s208 = sand.u32 %s27, 1
        %s209 = scalar_lea.sflag [#allocation3], %s208
        %s210 = sand.u32 %s27, 1
        %s211 = smul.addr %s210, 8
        %s212 = scalar_lea.vmem [#allocation2], %s211
        // Predicated region
        $region37: #{tpu_custom_call.1} parent=35 // pred_check
          %p213 = pneg %p40
        $region38: #{tpu_custom_call.1} parent=35 // pred_check_branch
          %215 = sbr.rel (%p213) target = $region40
        $region39: #{tpu_custom_call.1} parent=35 // pred_region
          %217 = dma.done %s209, 128
        $region40: #{tpu_custom_call.1} parent=35 // pred_fallthru
          _
        // Predicated region
        $region41: #{tpu_custom_call.1} parent=35 // pred_check
          %p218 = pneg %p61
        $region42: #{tpu_custom_call.1} parent=35 // pred_check_branch
          %220 = sbr.rel (%p218) target = $region44
        $region43: #{tpu_custom_call.1} parent=35 // pred_region
          %222 = dma.done [#allocation5], 1024
        $region44: #{tpu_custom_call.1} parent=35 // pred_fallthru
          _
        // Predicated region
        $region45: #{tpu_custom_call.1} parent=35 // pred_check
          %p223 = pneg %p82
        $region46: #{tpu_custom_call.1} parent=35 // pred_check_branch
          %225 = sbr.rel (%p223) target = $region48
        $region47: #{tpu_custom_call.1} parent=35 // pred_region
          %227 = dma.done [#allocation5], 256
        $region48: #{tpu_custom_call.1} parent=35 // pred_fallthru
          _
        %s228 = sand.u32 %s27, 1
        %s229 = scalar_lea.sflag [#allocation3], %s228
        %s230 = sand.u32 %s27, 1
        %s231 = smul.addr %s230, 8
        %s232 = scalar_lea.vmem [#allocation2], %s231
        %p233 = pneg %p40
        %p234 = pneg %p37
        %p235 = pneg %p61
        %p236 = pneg %p58
        %p237 = pneg %p82
        %p238 = pneg %p79
        %p239 = pneg %p103
        %p240 = pneg %p100
        %p241 = pneg %p129
        %p242 = pneg %p126
        %p243 = scmp.lt.s32.totalorder %s19, 1
        %s244 = scalar_select %p243, %s19, 1
        %s245 = smul.addr %s244, 3
        %s246 = smul.addr %s245, 8
        %s247 = scalar_lea.vmem %s4, %s246
        %p248 = scmp.lt.s32.totalorder %s19, 1
        %s249 = scalar_select %p248, %s19, 1
        %s250 = smul.addr %s249, 3
        %s251 = smul.addr %s250, 8
        %s252 = scalar_lea.vmem %s4, %s251
        %v253 = vld [vmem:[%s212] sm:$0xf]
        %v254 = vld [vmem:[%s212 + $0x4] sm:$0xf]
        %v255 = vld [vmem:[#allocation4] sm:$0xf]
        %v256 = vld [vmem:[#allocation4 + $0x4] sm:$0xf]
        %v257 = vld [vmem:[#allocation4 + $0x8] sm:$0xf]
        %v258 = vld [vmem:[#allocation4 + $0xc] sm:$0xf]
        %v259 = vld [vmem:[#allocation4 + $0x10] sm:$0xf]
        %v260 = vld [vmem:[#allocation4 + $0x14] sm:$0xf]
        %v261 = vld [vmem:[#allocation4 + $0x18] sm:$0xf]
        %v262 = vld [vmem:[#allocation4 + $0x1c] sm:$0xf]
        %v263 = vld [vmem:[#allocation4 + $0x20] sm:$0xf]
        %v264 = vld [vmem:[#allocation4 + $0x24] sm:$0xf]
        %v265 = vld [vmem:[#allocation4 + $0x28] sm:$0xf]
        %v266 = vld [vmem:[#allocation4 + $0x2c] sm:$0xf]
        %v267 = vld [vmem:[#allocation4 + $0x30] sm:$0xf]
        %v268 = vld [vmem:[#allocation4 + $0x34] sm:$0xf]
        %v269 = vld [vmem:[#allocation4 + $0x38] sm:$0xf]
        %v270 = vld [vmem:[#allocation4 + $0x3c] sm:$0xf]
        %v271 = vld [vmem:[%s3] sm:$0x1]
        %272 = vst [vmem:[%s252] sm:$0x1] %v271
        %v273 = vld [vmem:[#allocation6] sm:$0xff]
        %v274 = vld [vmem:[#allocation6 + $0x8] sm:$0xff]
        %v277 = vunpack.c.l.b16 %v253
        %v278 = vunpack.c.l.b16 %v254
        %v279 = vpack.c.b16 %v278, %v277
        %v297 = vunpack.c.l.b16 %v255
        %v298 = vunpack.c.l.b16 %v256
        %v299 = vunpack.c.l.b16 %v257
        %v300 = vunpack.c.l.b16 %v258
        %v301 = vunpack.c.l.b16 %v259
        %v302 = vunpack.c.l.b16 %v260
        %v303 = vunpack.c.l.b16 %v261
        %v304 = vunpack.c.l.b16 %v262
        %v305 = vunpack.c.l.b16 %v263
        %v306 = vunpack.c.l.b16 %v264
        %v307 = vunpack.c.l.b16 %v265
        %v308 = vunpack.c.l.b16 %v266
        %v309 = vunpack.c.l.b16 %v267
        %v310 = vunpack.c.l.b16 %v268
        %v311 = vunpack.c.l.b16 %v269
        %v312 = vunpack.c.l.b16 %v270
        %v313 = vpack.c.b16 %v298, %v297
        %v314 = vpack.c.b16 %v300, %v299
        %v315 = vpack.c.b16 %v302, %v301
        %v316 = vpack.c.b16 %v304, %v303
        %v317 = vpack.c.b16 %v306, %v305
        %v318 = vpack.c.b16 %v308, %v307
        %v319 = vpack.c.b16 %v310, %v309
        %v320 = vpack.c.b16 %v312, %v311
        %329 = vmatpush.bf16.msra.mxu0 %v320
        %330 = vmatpush.bf16.msra.mxu0 %v319
        %331 = vmatpush.bf16.msra.mxu0 %v318
        %332 = vmatpush.bf16.msra.mxu0 %v317
        %333 = vmatpush.bf16.msra.mxu0 %v316
        %334 = vmatpush.bf16.msra.mxu0 %v315
        %335 = vmatpush.bf16.msra.mxu0 %v314
        %336 = vmatpush.bf16.msra.mxu0 %v313
        %337 = vmatmul.bf16.gmra.mxu0 %v279
        %v338 = vpop.f32.mrf.mxu0
        %v339 = vadd.f32 %v273, %v338
        %v340 = vpop.f32.mrf.mxu0
        %v341 = vadd.f32 %v274, %v340
        %342 = vdwg.mxu0
        %343 = vst [vmem:[%s252 + $0x1] sm:$0xff] %v339
        %344 = vst [vmem:[%s252 + $0x9] sm:$0xff] %v341
        %p345 = scmp.lt.s32.totalorder %s19, 1
        %s346 = scalar_select %p345, %s19, 1
        %s347 = smul.addr %s346, 3
        %s348 = smul.addr %s347, 8
        %s349 = scalar_lea.vmem %s4, %s348
        // Predicated region
        $region49: #{tpu_custom_call.1} parent=35 // pred_check
          %p350 = pneg %p126
        $region50: #{tpu_custom_call.1} parent=35 // pred_check_branch
          %352 = sbr.rel (%p350) target = $region52
        $region51: #{tpu_custom_call.1} parent=35 // pred_region
          _
        $region52: #{tpu_custom_call.1} parent=35 // pred_fallthru
          _
      $region36: #{tpu_custom_call.1} parent=5 // pred_fallthru
        _
      %p353 = scmp.le.s32.totalorder 2, %s14
      // Predicated region
      $region53: #{tpu_custom_call.1} parent=5 // pred_check
        %p354 = pneg %p353
      $region54: #{tpu_custom_call.1} parent=5 // pred_check_branch
        %356 = sbr.rel (%p354) target = $region56
      $region55: #{tpu_custom_call.1} parent=5 // pred_region
        %s357 = ssub.s32 %s14, 2
        // Predicated region
        $region57: #{tpu_custom_call.1} parent=55 // pred_check
          %p358 = pneg %p132
        $region58: #{tpu_custom_call.1} parent=55 // pred_check_branch
          %360 = sbr.rel (%p358) target = $region60
        $region59: #{tpu_custom_call.1} parent=55 // pred_region
          %p361 = scmp.lt.s32.totalorder %s20, 1
          %s362 = scalar_select %p361, %s20, 1
          %s363 = smul.addr %s362, 3
          %s364 = smul.addr %s363, 8
          %s365 = scalar_lea.vmem %s4, %s364
        $region60: #{tpu_custom_call.1} parent=55 // pred_fallthru
          _
      $region56: #{tpu_custom_call.1} parent=5 // pred_fallthru
        _
    $region6: #{tpu_custom_call.1} parent=1 // loop_footer
      %s18 = sadd.s32 1, %s14
    $region7: #{tpu_custom_call.1} parent=1 // loop_footer_branch
      %13 = sbr.rel target = $region3
    $region8: #{tpu_custom_call.1} parent=1 // loop_exit
      _
    %366 = vsyncpa [#allocation3], 1
    %s367 = scalar_lea.sflag [#allocation3], 1
    %368 = vsyncpa %s367, 1
    %369 = vsyncpa [#allocation5], 1

</llo_original>
